<compile_context>
chip_gen: v7x
topology: tpu7x:2x2x1
jax: 0.10.0
libtpu: 0.0.40
codegen_flags: <defaults>
</compile_context>

<pallas_src>
import functools

import jax
import jax.numpy as jnp
from jax.experimental import pallas as pl
from jax.experimental.pallas import tpu as pltpu

MIDDLE_SHAPE = 256


def _round_up(x, m):
    return ((x + m - 1) // m) * m


def _mlp_kernel(s_ref, a_ref, w1_ref, b1_ref, w2_ref, b2_ref, w3_ref, b3_ref,
                out_ref, sa_ref):
    """Fused 3-layer MLP on one batch tile.

    s_ref:(TB,Ds) f32, a_ref:(TB,Da) f32, w1:(Ds+Da,256) bf16, w2:(256,256) bf16,
    w3:(1,256) bf16, b1/b2:(1,256) f32, b3:(1,1) f32, out:(1,1,TB) f32,
    sa_ref:(TB,Ds+Da) f32 VMEM scratch. All dots accumulate in f32 on the MXU;
    bias-add / relu stay in f32 on the VPU.
    """
    ds = s_ref.shape[1]
    da = a_ref.shape[1]

    # In-kernel "concat": pack (state | action) into one operand so layer 1 is a
    # single K=(Ds+Da) MXU matmul instead of two K-deficient ones. The small
    # packing stores ride the vst slot and hide under the MXU work.
    sa_ref[:, 0:ds] = s_ref[...]
    sa_ref[:, ds:ds + da] = a_ref[...]
    sa = sa_ref[...].astype(jnp.bfloat16)      # f32->bf16 cast stays in-kernel

    # Layer 1 + ReLU.
    h1 = jnp.dot(sa, w1_ref[...], preferred_element_type=jnp.float32)
    h1 = jnp.maximum(h1 + b1_ref[...], 0.0)                      # (TB, 256)

    # Layer 2 + ReLU.
    h2 = jnp.dot(h1.astype(jnp.bfloat16), w2_ref[...],
                 preferred_element_type=jnp.float32)
    h2 = jnp.maximum(h2 + b2_ref[...], 0.0)                      # (TB, 256)

    # Layer 3 (256 -> 1) as w3 @ h2^T (q@k^T pattern): lane-dense (1, TB) row,
    # so the output store is unmasked instead of TB/8 masked column stores.
    q = jax.lax.dot_general(
        w3_ref[...], h2.astype(jnp.bfloat16),
        dimension_numbers=(((1,), (1,)), ((), ())),
        preferred_element_type=jnp.float32)                      # (1, TB)
    out_ref[...] = (q + b3_ref[...]).reshape(out_ref.shape)


@functools.partial(jax.jit, static_argnames=("max_tile",))
def random_reward_forward(state, action, params, *, max_tile=2048):
    """state: (B, state_dim) f32, action: (B, action_dim) f32 -> (B, 1) f32."""
    w1, b1, w2, b2, w3, b3 = params
    B, Ds = state.shape
    _, Da = action.shape

    # --- batch tiling --------------------------------------------------------
    # * pad only to a multiple of 8 rows (never to a multiple of TB)
    # * use >=2 tiles whenever possible so the "parallel" batch axis spans both
    #   v7x TensorCores; cap tile size at max_tile for VMEM.
    B8 = _round_up(B, 8)
    min_tiles = 2 if B8 >= 16 else 1
    num_tiles = max(pl.cdiv(B8, max_tile), min_tiles)
    TB = _round_up(pl.cdiv(B8, num_tiles), 8)
    num_tiles = pl.cdiv(B8, TB)
    B_pad = num_tiles * TB

    if B_pad != B:  # at most a handful of zero rows; sliced off below
        state = jnp.pad(state, ((0, B_pad - B), (0, 0)))
        action = jnp.pad(action, ((0, B_pad - B), (0, 0)))

    flops = 2 * B_pad * ((Ds + Da) * MIDDLE_SHAPE
                         + MIDDLE_SHAPE * MIDDLE_SHAPE + MIDDLE_SHAPE)
    bytes_accessed = (
        state.size * state.dtype.itemsize + action.size * action.dtype.itemsize
        + sum(int(x.size) * x.dtype.itemsize for x in (w1, b1, w2, b2, w3, b3))
        + B_pad * 4)

    def act_spec(d):
        return pl.BlockSpec((TB, d), lambda i: (i, 0))

    def resident_spec(x):
        # Constant index_map: fetched once, stays VMEM-resident across tiles.
        return pl.BlockSpec(x.shape, lambda i: (0, 0))

    out = pl.pallas_call(
        _mlp_kernel,
        out_shape=jax.ShapeDtypeStruct((num_tiles, 1, TB), jnp.float32),
        grid_spec=pltpu.PrefetchScalarGridSpec(
            num_scalar_prefetch=0,
            grid=(num_tiles,),
            in_specs=[
                act_spec(Ds), act_spec(Da),
                resident_spec(w1), resident_spec(b1),
                resident_spec(w2), resident_spec(b2),
                resident_spec(w3), resident_spec(b3),
            ],
            out_specs=pl.BlockSpec((1, 1, TB), lambda i: (i, 0, 0)),
            scratch_shapes=[pltpu.VMEM((TB, Ds + Da), jnp.float32)],
        ),
        compiler_params=pltpu.CompilerParams(
            dimension_semantics=("parallel",),
            vmem_limit_bytes=32 * 1024 * 1024),
        cost_estimate=pl.CostEstimate(
            flops=flops, transcendentals=0, bytes_accessed=bytes_accessed),
    )(state, action, w1, b1, w2, b2, w3, b3)

    # (num_tiles, 1, TB) flattens row-major into batch order; drop pad rows.
    return out.reshape(-1)[:B].reshape(B, 1)


def init_params(key, state_dim, action_dim):
    """nn.Linear-style init (U[-1/sqrt(fan_in), +]); single fused W1, matmul
    weights stored bf16 in (in, out) layout, biases kept f32."""
    def linear(k, fan_in, fan_out):
        kw, kb = jax.random.split(k)
        bound = 1.0 / (fan_in ** 0.5)
        w = jax.random.uniform(kw, (fan_in, fan_out), jnp.float32, -bound, bound)
        b = jax.random.uniform(kb, (1, fan_out), jnp.float32, -bound, bound)
        return w, b

    k1, k2, k3 = jax.random.split(key, 3)
    w1, b1 = linear(k1, state_dim + action_dim, MIDDLE_SHAPE)
    w2, b2 = linear(k2, MIDDLE_SHAPE, MIDDLE_SHAPE)
    w3, b3 = linear(k3, MIDDLE_SHAPE, 1)
    return (w1.astype(jnp.bfloat16),            # (Ds+Da, 256)
            b1,                                  # (1, 256) f32
            w2.astype(jnp.bfloat16),            # (256, 256)
            b2,                                  # (1, 256) f32
            w3.T.astype(jnp.bfloat16),          # (1, 256) row vector
            b3.reshape(1, 1))                    # (1, 1) f32


def reference_forward(state, action, params):
    """Pure-JAX reference with identical numerics (bf16 operands, f32 acc)."""
    w1, b1, w2, b2, w3, b3 = params
    sa = jnp.concatenate([state, action], axis=1).astype(jnp.bfloat16)
    h1 = jnp.maximum(
        jnp.dot(sa, w1, preferred_element_type=jnp.float32) + b1, 0.0)
    h2 = jnp.maximum(
        jnp.dot(h1.astype(jnp.bfloat16), w2,
                preferred_element_type=jnp.float32) + b2, 0.0)
    return jnp.dot(h2.astype(jnp.bfloat16), w3.T,
                   preferred_element_type=jnp.float32) + b3


if __name__ == "__main__":
    state_dim, action_dim = 16, 8
    key = jax.random.PRNGKey(0)
    kp, kd = jax.random.split(key)
    params = init_params(kp, state_dim, action_dim)

    # batch=8 exercises the single-tile path; batch=20 exercises the ragged
    # (padded) two-tile path with the "parallel" batch axis.
    for batch in (8, 20):
        ks, ka = jax.random.split(jax.random.fold_in(kd, batch))
        state = jax.random.normal(ks, (batch, state_dim), jnp.float32)
        action = jax.random.normal(ka, (batch, action_dim), jnp.float32)

        out = jax.block_until_ready(random_reward_forward(state, action, params))
        ref = reference_forward(state, action, params)

        assert out.shape == (batch, 1)
        assert jnp.allclose(out, ref, atol=2e-3, rtol=2e-3), (
            f"batch={batch}: max abs err {jnp.max(jnp.abs(out - ref))}")

    print("KERNEL_OK")
</pallas_src>

<mosaic_0001>
module attributes {stable_mosaic.version = 11 : i64} {
  func.func @_mlp_kernel(%arg0: i32, %arg1: memref<8x16xf32, #tpu.memory_space<vmem>>, %arg2: memref<8x8xf32, #tpu.memory_space<vmem>>, %arg3: memref<24x256xbf16, #tpu.memory_space<vmem>>, %arg4: memref<1x256xf32, #tpu.memory_space<vmem>>, %arg5: memref<256x256xbf16, #tpu.memory_space<vmem>>, %arg6: memref<1x256xf32, #tpu.memory_space<vmem>>, %arg7: memref<1x256xbf16, #tpu.memory_space<vmem>>, %arg8: memref<1x1xf32, #tpu.memory_space<vmem>>, %arg9: memref<1x1x8xf32, #tpu.memory_space<vmem>>, %arg10: memref<8x24xf32, #tpu.memory_space<vmem>>) attributes {dimension_semantics = [#tpu.dimension_semantics<parallel>], iteration_bounds = array<i64: 1>, scalar_prefetch = 0 : i64, scratch_operands = 1 : i64, tpu.core_type = #tpu.core_type<tc>, window_params = [{transform_indices = @transform_0, window_bounds = array<i64: 8, 16>}, {transform_indices = @transform_1, window_bounds = array<i64: 8, 8>}, {pipeline_mode = #tpu.pipeline_mode<synchronous>, transform_indices = @transform_2, window_bounds = array<i64: 24, 256>}, {pipeline_mode = #tpu.pipeline_mode<synchronous>, transform_indices = @transform_3, window_bounds = array<i64: 1, 256>}, {pipeline_mode = #tpu.pipeline_mode<synchronous>, transform_indices = @transform_4, window_bounds = array<i64: 256, 256>}, {pipeline_mode = #tpu.pipeline_mode<synchronous>, transform_indices = @transform_5, window_bounds = array<i64: 1, 256>}, {pipeline_mode = #tpu.pipeline_mode<synchronous>, transform_indices = @transform_6, window_bounds = array<i64: 1, 256>}, {pipeline_mode = #tpu.pipeline_mode<synchronous>, transform_indices = @transform_7, window_bounds = array<i64: 1, 1>}, {transform_indices = @transform_8, window_bounds = array<i64: 1, 1, 8>}]} {
    %c0 = arith.constant 0 : index
    %c0_0 = arith.constant 0 : index
    %0 = vector.load %arg1[%c0, %c0_0] : memref<8x16xf32, #tpu.memory_space<vmem>>, vector<8x16xf32>
    %c0_1 = arith.constant 0 : index
    %c0_2 = arith.constant 0 : index
    %1 = vector.load %arg10[%c0_1, %c0_2] : memref<8x24xf32, #tpu.memory_space<vmem>>, vector<8x16xf32>
    tpu.vector_store %arg10[%c0_1, %c0_2], %0 {strides = array<i32>} : memref<8x24xf32, #tpu.memory_space<vmem>>, vector<8x16xf32>,
    %c0_3 = arith.constant 0 : index
    %c0_4 = arith.constant 0 : index
    %2 = vector.load %arg2[%c0_3, %c0_4] : memref<8x8xf32, #tpu.memory_space<vmem>>, vector<8x8xf32>
    %c0_5 = arith.constant 0 : index
    %c16 = arith.constant 16 : index
    %3 = vector.load %arg10[%c0_5, %c16] : memref<8x24xf32, #tpu.memory_space<vmem>>, vector<8x8xf32>
    tpu.vector_store %arg10[%c0_5, %c16], %2 {strides = array<i32>} : memref<8x24xf32, #tpu.memory_space<vmem>>, vector<8x8xf32>,
    %c0_6 = arith.constant 0 : index
    %c0_7 = arith.constant 0 : index
    %4 = vector.load %arg10[%c0_6, %c0_7] : memref<8x24xf32, #tpu.memory_space<vmem>>, vector<8x24xf32>
    %5 = arith.truncf %4 : vector<8x24xf32> to vector<8x24xbf16>
    %c0_8 = arith.constant 0 : index
    %c0_9 = arith.constant 0 : index
    %6 = vector.load %arg3[%c0_8, %c0_9] : memref<24x256xbf16, #tpu.memory_space<vmem>>, vector<24x256xbf16>
    %cst = arith.constant dense<0.000000e+00> : vector<8x256xf32>
    %7 = tpu.matmul %5, %6, %cst {dimension_numbers = #tpu.dot_dimension_numbers<[1], [0], [0], [1], [0, 0, 1, 1], [], []>} : vector<8x24xbf16>, vector<24x256xbf16>, vector<8x256xf32> -> vector<8x256xf32>
    %c0_10 = arith.constant 0 : index
    %c0_11 = arith.constant 0 : index
    %8 = vector.load %arg4[%c0_10, %c0_11] : memref<1x256xf32, #tpu.memory_space<vmem>>, vector<1x256xf32>
    %9 = vector.broadcast %8 : vector<1x256xf32> to vector<8x256xf32>
    %10 = arith.addf %7, %9 : vector<8x256xf32>
    %cst_12 = arith.constant 0.000000e+00 : f32
    %11 = vector.broadcast %cst_12 : f32 to vector<8x256xf32>
    %12 = arith.maximumf %10, %11 : vector<8x256xf32>
    %13 = arith.truncf %12 : vector<8x256xf32> to vector<8x256xbf16>
    %c0_13 = arith.constant 0 : index
    %c0_14 = arith.constant 0 : index
    %14 = vector.load %arg5[%c0_13, %c0_14] : memref<256x256xbf16, #tpu.memory_space<vmem>>, vector<256x256xbf16>
    %cst_15 = arith.constant dense<0.000000e+00> : vector<8x256xf32>
    %15 = tpu.matmul %13, %14, %cst_15 {dimension_numbers = #tpu.dot_dimension_numbers<[1], [0], [0], [1], [0, 0, 1, 1], [], []>} : vector<8x256xbf16>, vector<256x256xbf16>, vector<8x256xf32> -> vector<8x256xf32>
    %c0_16 = arith.constant 0 : index
    %c0_17 = arith.constant 0 : index
    %16 = vector.load %arg6[%c0_16, %c0_17] : memref<1x256xf32, #tpu.memory_space<vmem>>, vector<1x256xf32>
    %17 = vector.broadcast %16 : vector<1x256xf32> to vector<8x256xf32>
    %18 = arith.addf %15, %17 : vector<8x256xf32>
    %cst_18 = arith.constant 0.000000e+00 : f32
    %19 = vector.broadcast %cst_18 : f32 to vector<8x256xf32>
    %20 = arith.maximumf %18, %19 : vector<8x256xf32>
    %c0_19 = arith.constant 0 : index
    %c0_20 = arith.constant 0 : index
    %21 = vector.load %arg7[%c0_19, %c0_20] : memref<1x256xbf16, #tpu.memory_space<vmem>>, vector<1x256xbf16>
    %22 = arith.truncf %20 : vector<8x256xf32> to vector<8x256xbf16>
    %cst_21 = arith.constant dense<0.000000e+00> : vector<1x8xf32>
    %23 = tpu.matmul %21, %22, %cst_21 {dimension_numbers = #tpu.dot_dimension_numbers<[1], [1], [0], [0], [0, 0, 1, 0], [], []>} : vector<1x256xbf16>, vector<8x256xbf16>, vector<1x8xf32> -> vector<1x8xf32>
    %c0_22 = arith.constant 0 : index
    %c0_23 = arith.constant 0 : index
    %24 = vector.load %arg8[%c0_22, %c0_23] : memref<1x1xf32, #tpu.memory_space<vmem>>, vector<1x1xf32>
    %25 = vector.broadcast %24 : vector<1x1xf32> to vector<1x8xf32>
    %26 = arith.addf %23, %25 : vector<1x8xf32>
    %27 = vector.shape_cast %26 : vector<1x8xf32> to vector<1x1x8xf32>
    %c0_24 = arith.constant 0 : index
    %c0_25 = arith.constant 0 : index
    %c0_26 = arith.constant 0 : index
    %28 = vector.load %arg9[%c0_24, %c0_25, %c0_26] : memref<1x1x8xf32, #tpu.memory_space<vmem>>, vector<1x1x8xf32>
    tpu.vector_store %arg9[%c0_24, %c0_25, %c0_26], %27 {strides = array<i32>} : memref<1x1x8xf32, #tpu.memory_space<vmem>>, vector<1x1x8xf32>,
    return
  }
  func.func @transform_0(%arg0: i32) -> (i32, i32) {
    %c0_i32 = arith.constant 0 : i32
    %c0_i32_0 = arith.constant 0 : i32
    return %arg0, %c0_i32 : i32, i32
  }
  func.func @transform_1(%arg0: i32) -> (i32, i32) {
    %c0_i32 = arith.constant 0 : i32
    %c0_i32_0 = arith.constant 0 : i32
    return %arg0, %c0_i32 : i32, i32
  }
  func.func @transform_2(%arg0: i32) -> (i32, i32) {
    %c0_i32 = arith.constant 0 : i32
    %c0_i32_0 = arith.constant 0 : i32
    %c0_i32_1 = arith.constant 0 : i32
    return %c0_i32, %c0_i32_0 : i32, i32
  }
  func.func @transform_3(%arg0: i32) -> (i32, i32) {
    %c0_i32 = arith.constant 0 : i32
    %c0_i32_0 = arith.constant 0 : i32
    %c0_i32_1 = arith.constant 0 : i32
    return %c0_i32, %c0_i32_0 : i32, i32
  }
  func.func @transform_4(%arg0: i32) -> (i32, i32) {
    %c0_i32 = arith.constant 0 : i32
    %c0_i32_0 = arith.constant 0 : i32
    %c0_i32_1 = arith.constant 0 : i32
    return %c0_i32, %c0_i32_0 : i32, i32
  }
  func.func @transform_5(%arg0: i32) -> (i32, i32) {
    %c0_i32 = arith.constant 0 : i32
    %c0_i32_0 = arith.constant 0 : i32
    %c0_i32_1 = arith.constant 0 : i32
    return %c0_i32, %c0_i32_0 : i32, i32
  }
  func.func @transform_6(%arg0: i32) -> (i32, i32) {
    %c0_i32 = arith.constant 0 : i32
    %c0_i32_0 = arith.constant 0 : i32
    %c0_i32_1 = arith.constant 0 : i32
    return %c0_i32, %c0_i32_0 : i32, i32
  }
  func.func @transform_7(%arg0: i32) -> (i32, i32) {
    %c0_i32 = arith.constant 0 : i32
    %c0_i32_0 = arith.constant 0 : i32
    %c0_i32_1 = arith.constant 0 : i32
    return %c0_i32, %c0_i32_0 : i32, i32
  }
  func.func @transform_8(%arg0: i32) -> (i32, i32, i32) {
    %c0_i32 = arith.constant 0 : i32
    %c0_i32_0 = arith.constant 0 : i32
    %c0_i32_1 = arith.constant 0 : i32
    return %arg0, %c0_i32, %c0_i32_0 : i32, i32, i32
  }
}

</mosaic_0001>

<llo_original>
// kernel: random_reward_forward.1
$region0: #{random_reward_forward.1}
  #allocation0 [shape = 'u32[]', space=smem, size = 0x4, offset = 0x4, fixed_abs, tag = 'smem constant byte address 0x4 - core index']
  #allocation1 [shape = 'u32[144,128]{1,0:T(1,128)}', space=vmem, size = 0x12000, scoped, tag = 'internal scratch']
  #allocation2 [shape = 'f32[8,24]{1,0:T(8,128)}', space=vmem, size = 0x1000, scoped, tag = 'scratch operand']
  #allocation3 [shape = 'f32[1,1]{1,0:T(1,128)S(1)}', space=vmem, size = 0x200, scoped, tag = 'scoped memory for random_reward_forward.1']
  %s0 = inlined_call_operand.hbm [shape: f32[8,16], index: 0, kind: input, shape index: {}]
  %s1 = inlined_call_operand.hbm [shape: f32[8,8], index: 1, kind: input, shape index: {}]
  %s2 = inlined_call_operand.hbm [shape: bf16[24,256], index: 2, kind: input, shape index: {}]
  %s3 = inlined_call_operand.vmem [shape: f32[1,256], index: 3, kind: input, shape index: {}]
  %s4 = inlined_call_operand.hbm [shape: bf16[256,256], index: 4, kind: input, shape index: {}]
  %s5 = inlined_call_operand.vmem [shape: f32[1,256], index: 5, kind: input, shape index: {}]
  %s6 = inlined_call_operand.vmem [shape: bf16[1,256], index: 6, kind: input, shape index: {}]
  %s7 = inlined_call_operand.<no memory space> [shape: f32[1,1], index: 7, kind: input, shape index: {}]
  %s8 = inlined_call_operand.hbm [shape: f32[1,1,8], index: 8, kind: output, shape index: {}]
  %s9 = sld [smem:[#allocation0]]
  $region58: #{random_reward_forward.1} parent=0
    _
  %s11 = ssub.s32 1, %s9
  %s12 = scalar_select 0, %s11, %s9
  %v13 = vstv %s7
  %14 = vst [vmem:[#allocation3] sm:$0x1] %v13
  $region1: #{random_reward_forward.1} parent=0
    #allocation4 [shape = 'u8[4096]{0}', space=vmem, size = 0x1000, scoped, tag = 'input window, operand 0, single buffered']
    #allocation5 [shape = 's32[1]{0}', space=sflag, size = 0x4, scoped, tag = 'scoped memory for random_reward_forward.1']
    #allocation6 [shape = 's32[1]{0}', space=sflag, size = 0x4, scoped, tag = 'scoped memory for random_reward_forward.1']
    #allocation7 [shape = 'u8[4096]{0}', space=vmem, size = 0x1000, scoped, tag = 'input window, operand 1, single buffered']
    #allocation8 [shape = 's32[1]{0}', space=sflag, size = 0x4, scoped, tag = 'scoped memory for random_reward_forward.1']
    #allocation9 [shape = 'u8[12288]{0}', space=vmem, size = 0x3000, scoped, tag = 'input window, operand 2, single buffered']
    #allocation10 [shape = 'u8[131072]{0}', space=vmem, size = 0x20000, scoped, tag = 'input window, operand 4, single buffered']
    #allocation11 [shape = 's32[1]{0}', space=sflag, size = 0x4, scoped, tag = 'scoped memory for random_reward_forward.1']
    #allocation12 [shape = 'u8[512]{0}', space=vmem, size = 0x400, scoped, tag = 'output window, operand 0, single buffered']
    %15 = vsyncpa [#allocation5], 0
    %16 = vsyncpa [#allocation8], 0
    %17 = vsyncpa [#allocation11], 0
    %18 = vsyncpa [#allocation6], 0
    // Predicated region
    $region2: #{random_reward_forward.1} parent=1 // pred_check
      _
    $region3: #{random_reward_forward.1} parent=1 // pred_check_branch
      %20 = sbr.rel (0) target = $region5
    $region4: #{random_reward_forward.1} parent=1 // pred_region
      %s22 = ssub.s32 128, 128
      %23 = vsyncadd [#allocation5], %s22
      %s25 = sshll.u32 [#allocation4], 4
      %s26 = int_to_ptr.vmem [resolvable:$true] %s25
      %28 = dma.hbm_to_vmem [thread:$0]  %s0, 128, %s26, [#allocation5]
    $region5: #{random_reward_forward.1} parent=1 // pred_fallthru
      _
    // Predicated region
    $region6: #{random_reward_forward.1} parent=1 // pred_check
      _
    $region7: #{random_reward_forward.1} parent=1 // pred_check_branch
      %30 = sbr.rel (0) target = $region9
    $region8: #{random_reward_forward.1} parent=1 // pred_region
      %s32 = ssub.s32 128, 128
      %33 = vsyncadd [#allocation8], %s32
      %s35 = sshll.u32 [#allocation7], 4
      %s36 = int_to_ptr.vmem [resolvable:$true] %s35
      %38 = dma.hbm_to_vmem [thread:$0]  %s1, 128, %s36, [#allocation8]
    $region9: #{random_reward_forward.1} parent=1 // pred_fallthru
      _
    // Predicated region
    $region10: #{random_reward_forward.1} parent=1 // pred_check
      _
    $region11: #{random_reward_forward.1} parent=1 // pred_check_branch
      %40 = sbr.rel (0) target = $region13
    $region12: #{random_reward_forward.1} parent=1 // pred_region
      %s42 = ssub.s32 384, 384
      %43 = vsyncadd [#allocation8], %s42
      %s44 = sshll.u32 [#allocation9], 4
      %s45 = int_to_ptr.vmem [resolvable:$true] %s44
      %50 = dma.hbm_to_vmem [thread:$0]  %s2, 384, %s45, [#allocation8], 128, 128, 8
    $region13: #{random_reward_forward.1} parent=1 // pred_fallthru
      _
    // Predicated region
    $region14: #{random_reward_forward.1} parent=1 // pred_check
      _
    $region15: #{random_reward_forward.1} parent=1 // pred_check_branch
      %52 = sbr.rel (0) target = $region17
    $region16: #{random_reward_forward.1} parent=1 // pred_region
      _
    $region17: #{random_reward_forward.1} parent=1 // pred_fallthru
      _
    // Predicated region
    $region18: #{random_reward_forward.1} parent=1 // pred_check
      _
    $region19: #{random_reward_forward.1} parent=1 // pred_check_branch
      %54 = sbr.rel (0) target = $region21
    $region20: #{random_reward_forward.1} parent=1 // pred_region
      %s56 = ssub.s32 4096, 4096
      %57 = vsyncadd [#allocation11], %s56
      %s58 = sshll.u32 [#allocation10], 4
      %s59 = int_to_ptr.vmem [resolvable:$true] %s58
      %64 = dma.hbm_to_vmem [thread:$0]  %s4, 4096, %s59, [#allocation11], 128, 128, 8
    $region21: #{random_reward_forward.1} parent=1 // pred_fallthru
      _
    // Predicated region
    $region22: #{random_reward_forward.1} parent=1 // pred_check
      _
    $region23: #{random_reward_forward.1} parent=1 // pred_check_branch
      %66 = sbr.rel (0) target = $region25
    $region24: #{random_reward_forward.1} parent=1 // pred_region
      _
    $region25: #{random_reward_forward.1} parent=1 // pred_fallthru
      _
    // Predicated region
    $region26: #{random_reward_forward.1} parent=1 // pred_check
      _
    $region27: #{random_reward_forward.1} parent=1 // pred_check_branch
      %68 = sbr.rel (0) target = $region29
    $region28: #{random_reward_forward.1} parent=1 // pred_region
      _
    $region29: #{random_reward_forward.1} parent=1 // pred_fallthru
      _
    // Predicated region
    $region30: #{random_reward_forward.1} parent=1 // pred_check
      _
    $region31: #{random_reward_forward.1} parent=1 // pred_check_branch
      %70 = sbr.rel (0) target = $region33
    $region32: #{random_reward_forward.1} parent=1 // pred_region
      _
    $region33: #{random_reward_forward.1} parent=1 // pred_fallthru
      _
    // Predicated region
    $region34: #{random_reward_forward.1} parent=1 // pred_check
      _
    $region35: #{random_reward_forward.1} parent=1 // pred_check_branch
      %72 = sbr.rel (0) target = $region37
    $region36: #{random_reward_forward.1} parent=1 // pred_region
      %73 = dma.done [#allocation5], 128
    $region37: #{random_reward_forward.1} parent=1 // pred_fallthru
      _
    // Predicated region
    $region38: #{random_reward_forward.1} parent=1 // pred_check
      _
    $region39: #{random_reward_forward.1} parent=1 // pred_check_branch
      %75 = sbr.rel (0) target = $region41
    $region40: #{random_reward_forward.1} parent=1 // pred_region
      %76 = dma.done [#allocation8], 128
    $region41: #{random_reward_forward.1} parent=1 // pred_fallthru
      _
    // Predicated region
    $region42: #{random_reward_forward.1} parent=1 // pred_check
      _
    $region43: #{random_reward_forward.1} parent=1 // pred_check_branch
      %78 = sbr.rel (0) target = $region45
    $region44: #{random_reward_forward.1} parent=1 // pred_region
      %79 = dma.done [#allocation8], 384
    $region45: #{random_reward_forward.1} parent=1 // pred_fallthru
      _
    // Predicated region
    $region46: #{random_reward_forward.1} parent=1 // pred_check
      _
    $region47: #{random_reward_forward.1} parent=1 // pred_check_branch
      %81 = sbr.rel (0) target = $region49
    $region48: #{random_reward_forward.1} parent=1 // pred_region
      %82 = dma.done [#allocation11], 4096
    $region49: #{random_reward_forward.1} parent=1 // pred_fallthru
      _
    %v84 = vld [vmem:[#allocation4] sm:$0xff]
    %vm85 = vcmask 130048
    %86 = vst.msk [vmem:[#allocation2] sm:$0xff] %vm85, %v84
    %v87 = vld [vmem:[#allocation7] sm:$0xff]
    %89 = vrot.lane.b32.xlu0 %v87, 16
    %v90 = vpop.permute.xlu0 %89
    %vm92 = vcmask 195712
    %93 = vst.msk [vmem:[#allocation2] sm:$0xff] %vm92, %v90
    %v94 = vld [vmem:[#allocation2] sm:$0xff]
    %v95 = vpack.c.bf16 %v94, %v94
    %v96 = vld [vmem:[#allocation9] sm:$0xff]
    %v97 = vld [vmem:[#allocation9 + $0x8] sm:$0xff]
    %v98 = vld [vmem:[#allocation9 + $0x10] sm:$0xff]
    %v99 = vld [vmem:[%s3] sm:$0x3]
    %v101 = vlaneseq
    %v102 = vshrl.u32 %v101, 7
    %v103 = vsub.s32 0, %v102
    %v104 = vrot.slane %v99, %v103
    %v105 = vlaneseq
    %v106 = vshrl.u32 %v105, 7
    %v107 = vsub.s32 1, %v106
    %v108 = vrot.slane %v99, %v107
    %v114 = vunpack.c.l.b16 %v96
    %v115 = vunpack.c.h.b16 %v96
    %v116 = vunpack.c.l.b16 %v97
    %v117 = vunpack.c.h.b16 %v97
    %v118 = vunpack.c.l.b16 %v98
    %v119 = vunpack.c.h.b16 %v98
    %v120 = vpack.c.b16 %v116, %v114
    %v121 = vpack.c.b16 %v117, %v115
    %v122 = vpack.c.b16 %v118, %v118
    %v123 = vpack.c.b16 %v119, %v119
    %vm126 = vcmask 195584
    %v128 = vsel %vm126, %v95, 0
    %vm130 = vcmask 1043456
    %v132 = vsel %vm130, %v122, 0
    %v135 = vsel %vm130, %v123, 0
    %137 = vmatprep.subr.bf16.mxu0 %v121
    %138 = vmatpush1.bf16.msra.mxu0 %v120
    %139 = vmatprep.subr.bf16.mxu0 %v135
    %140 = vmatpush1.bf16.msra.mxu0 %v132
    %141 = vmatprep.subr.bf16.mxu0 0
    %142 = vmatpush1.bf16.msra.mxu0 0
    %143 = vmatprep.subr.bf16.mxu0 0
    %144 = vmatpush1.bf16.msra.mxu0 0
    %145 = vmatprep.subr.bf16.mxu0 0
    %146 = vmatpush1.bf16.msra.mxu0 0
    %147 = vmatprep.subr.bf16.mxu0 0
    %148 = vmatpush1.bf16.msra.mxu0 0
    %149 = vmatprep.subr.bf16.mxu0 0
    %150 = vmatpush1.bf16.msra.mxu0 0
    %151 = vmatprep.subr.bf16.mxu0 0
    %152 = vmatpush1.bf16.msra.mxu0 0
    %153 = vmatprep.subr.bf16.mxu0 0
    %154 = vmatpush1.bf16.msra.mxu0 0
    %155 = vmatprep.subr.bf16.mxu0 0
    %156 = vmatpush1.bf16.msra.mxu0 0
    %157 = vmatprep.subr.bf16.mxu0 0
    %158 = vmatpush1.bf16.msra.mxu0 0
    %159 = vmatprep.subr.bf16.mxu0 0
    %160 = vmatpush1.bf16.msra.mxu0 0
    %161 = vmatprep.subr.bf16.mxu0 0
    %162 = vmatpush1.bf16.msra.mxu0 0
    %163 = vmatprep.subr.bf16.mxu0 0
    %164 = vmatpush1.bf16.msra.mxu0 0
    %165 = vmatprep.subr.bf16.mxu0 0
    %166 = vmatpush1.bf16.msra.mxu0 0
    %167 = vmatprep.subr.bf16.mxu0 0
    %168 = vmatpush1.bf16.msra.mxu0 0
    %169 = vmatprep.mubr.bf16.mxu0 0
    %170 = vmatmul.mubr.bf16.gmra.mrb[0].mxu0 %v128
    %v171 = vpop.f32.mrb[0].mxu0
    %v172 = vadd.f32 %v104, %v171
    %v173 = vpop.f32.mrb[0].mxu0
    %v174 = vadd.f32 %v108, %v173
    %v175 = vpop.f32.mrb[0].mxu0
    %v176 = vpop.f32.mrb[0].mxu0
    %177 = vdwg.mxu0
    %v178 = vmax.f32 %v172, 0.0
    %v179 = vmax.f32 %v174, 0.0
    %v180 = vpack.c.bf16 %v178, %v178
    %v181 = vpack.c.bf16 %v179, %v179
    %v182 = vld [vmem:[#allocation10] sm:$0xff]
    %v183 = vld [vmem:[#allocation10 + $0x8] sm:$0xff]
    %v184 = vld [vmem:[#allocation10 + $0x10] sm:$0xff]
    %v185 = vld [vmem:[#allocation10 + $0x18] sm:$0xff]
    %v186 = vld [vmem:[#allocation10 + $0x20] sm:$0xff]
    %v187 = vld [vmem:[#allocation10 + $0x28] sm:$0xff]
    %v188 = vld [vmem:[#allocation10 + $0x30] sm:$0xff]
    %v189 = vld [vmem:[#allocation10 + $0x38] sm:$0xff]
    %v190 = vld [vmem:[#allocation10 + $0x40] sm:$0xff]
    %v191 = vld [vmem:[#allocation10 + $0x48] sm:$0xff]
    %v192 = vld [vmem:[#allocation10 + $0x50] sm:$0xff]
    %v193 = vld [vmem:[#allocation10 + $0x58] sm:$0xff]
    %v194 = vld [vmem:[#allocation10 + $0x60] sm:$0xff]
    %v195 = vld [vmem:[#allocation10 + $0x68] sm:$0xff]
    %v196 = vld [vmem:[#allocation10 + $0x70] sm:$0xff]
    %v197 = vld [vmem:[#allocation10 + $0x78] sm:$0xff]
    %v198 = vld [vmem:[#allocation10 + $0x80] sm:$0xff]
    %v199 = vld [vmem:[#allocation10 + $0x88] sm:$0xff]
    %v200 = vld [vmem:[#allocation10 + $0x90] sm:$0xff]
    %v201 = vld [vmem:[#allocation10 + $0x98] sm:$0xff]
    %v202 = vld [vmem:[#allocation10 + $0xa0] sm:$0xff]
    %v203 = vld [vmem:[#allocation10 + $0xa8] sm:$0xff]
    %v204 = vld [vmem:[#allocation10 + $0xb0] sm:$0xff]
    %v205 = vld [vmem:[#allocation10 + $0xb8] sm:$0xff]
    %v206 = vld [vmem:[#allocation10 + $0xc0] sm:$0xff]
    %v207 = vld [vmem:[#allocation10 + $0xc8] sm:$0xff]
    %v208 = vld [vmem:[#allocation10 + $0xd0] sm:$0xff]
    %v209 = vld [vmem:[#allocation10 + $0xd8] sm:$0xff]
    %v210 = vld [vmem:[#allocation10 + $0xe0] sm:$0xff]
    %v211 = vld [vmem:[#allocation10 + $0xe8] sm:$0xff]
    %v212 = vld [vmem:[#allocation10 + $0xf0] sm:$0xff]
    %v213 = vld [vmem:[#allocation10 + $0xf8] sm:$0xff]
    %v214 = vld [vmem:[%s5] sm:$0x3]
    %v216 = vlaneseq
    %v217 = vshrl.u32 %v216, 7
    %v218 = vsub.s32 0, %v217
    %v219 = vrot.slane %v214, %v218
    %v220 = vlaneseq
    %v221 = vshrl.u32 %v220, 7
    %v222 = vsub.s32 1, %v221
    %v223 = vrot.slane %v214, %v222
    %v258 = vunpack.c.l.b16 %v182
    %v259 = vunpack.c.h.b16 %v182
    %v260 = vunpack.c.l.b16 %v183
    %v261 = vunpack.c.h.b16 %v183
    %v262 = vunpack.c.l.b16 %v184
    %v263 = vunpack.c.h.b16 %v184
    %v264 = vunpack.c.l.b16 %v185
    %v265 = vunpack.c.h.b16 %v185
    %v266 = vunpack.c.l.b16 %v186
    %v267 = vunpack.c.h.b16 %v186
    %v268 = vunpack.c.l.b16 %v187
    %v269 = vunpack.c.h.b16 %v187
    %v270 = vunpack.c.l.b16 %v188
    %v271 = vunpack.c.h.b16 %v188
    %v272 = vunpack.c.l.b16 %v189
    %v273 = vunpack.c.h.b16 %v189
    %v274 = vunpack.c.l.b16 %v190
    %v275 = vunpack.c.h.b16 %v190
    %v276 = vunpack.c.l.b16 %v191
    %v277 = vunpack.c.h.b16 %v191
    %v278 = vunpack.c.l.b16 %v192
    %v279 = vunpack.c.h.b16 %v192
    %v280 = vunpack.c.l.b16 %v193
    %v281 = vunpack.c.h.b16 %v193
    %v282 = vunpack.c.l.b16 %v194
    %v283 = vunpack.c.h.b16 %v194
    %v284 = vunpack.c.l.b16 %v195
    %v285 = vunpack.c.h.b16 %v195
    %v286 = vunpack.c.l.b16 %v196
    %v287 = vunpack.c.h.b16 %v196
    %v288 = vunpack.c.l.b16 %v197
    %v289 = vunpack.c.h.b16 %v197
    %v290 = vunpack.c.l.b16 %v198
    %v291 = vunpack.c.h.b16 %v198
    %v292 = vunpack.c.l.b16 %v199
    %v293 = vunpack.c.h.b16 %v199
    %v294 = vunpack.c.l.b16 %v200
    %v295 = vunpack.c.h.b16 %v200
    %v296 = vunpack.c.l.b16 %v201
    %v297 = vunpack.c.h.b16 %v201
    %v298 = vunpack.c.l.b16 %v202
    %v299 = vunpack.c.h.b16 %v202
    %v300 = vunpack.c.l.b16 %v203
    %v301 = vunpack.c.h.b16 %v203
    %v302 = vunpack.c.l.b16 %v204
    %v303 = vunpack.c.h.b16 %v204
    %v304 = vunpack.c.l.b16 %v205
    %v305 = vunpack.c.h.b16 %v205
    %v306 = vunpack.c.l.b16 %v206
    %v307 = vunpack.c.h.b16 %v206
    %v308 = vunpack.c.l.b16 %v207
    %v309 = vunpack.c.h.b16 %v207
    %v310 = vunpack.c.l.b16 %v208
    %v311 = vunpack.c.h.b16 %v208
    %v312 = vunpack.c.l.b16 %v209
    %v313 = vunpack.c.h.b16 %v209
    %v314 = vunpack.c.l.b16 %v210
    %v315 = vunpack.c.h.b16 %v210
    %v316 = vunpack.c.l.b16 %v211
    %v317 = vunpack.c.h.b16 %v211
    %v318 = vunpack.c.l.b16 %v212
    %v319 = vunpack.c.h.b16 %v212
    %v320 = vunpack.c.l.b16 %v213
    %v321 = vunpack.c.h.b16 %v213
    %v322 = vpack.c.b16 %v260, %v258
    %v323 = vpack.c.b16 %v261, %v259
    %v324 = vpack.c.b16 %v264, %v262
    %v325 = vpack.c.b16 %v265, %v263
    %v326 = vpack.c.b16 %v268, %v266
    %v327 = vpack.c.b16 %v269, %v267
    %v328 = vpack.c.b16 %v272, %v270
    %v329 = vpack.c.b16 %v273, %v271
    %v330 = vpack.c.b16 %v276, %v274
    %v331 = vpack.c.b16 %v277, %v275
    %v332 = vpack.c.b16 %v280, %v278
    %v333 = vpack.c.b16 %v281, %v279
    %v334 = vpack.c.b16 %v284, %v282
    %v335 = vpack.c.b16 %v285, %v283
    %v336 = vpack.c.b16 %v288, %v286
    %v337 = vpack.c.b16 %v289, %v287
    %v338 = vpack.c.b16 %v292, %v290
    %v339 = vpack.c.b16 %v293, %v291
    %v340 = vpack.c.b16 %v296, %v294
    %v341 = vpack.c.b16 %v297, %v295
    %v342 = vpack.c.b16 %v300, %v298
    %v343 = vpack.c.b16 %v301, %v299
    %v344 = vpack.c.b16 %v304, %v302
    %v345 = vpack.c.b16 %v305, %v303
    %v346 = vpack.c.b16 %v308, %v306
    %v347 = vpack.c.b16 %v309, %v307
    %v348 = vpack.c.b16 %v312, %v310
    %v349 = vpack.c.b16 %v313, %v311
    %v350 = vpack.c.b16 %v316, %v314
    %v351 = vpack.c.b16 %v317, %v315
    %v352 = vpack.c.b16 %v320, %v318
    %v353 = vpack.c.b16 %v321, %v319
    %386 = vmatprep.subr.bf16.mxu0 %v323
    %387 = vmatpush1.bf16.msra.mxu0 %v322
    %388 = vmatprep.subr.bf16.mxu0 %v325
    %389 = vmatpush1.bf16.msra.mxu0 %v324
    %390 = vmatprep.subr.bf16.mxu0 %v327
    %391 = vmatpush1.bf16.msra.mxu0 %v326
    %392 = vmatprep.subr.bf16.mxu0 %v329
    %393 = vmatpush1.bf16.msra.mxu0 %v328
    %394 = vmatprep.subr.bf16.mxu0 %v331
    %395 = vmatpush1.bf16.msra.mxu0 %v330
    %396 = vmatprep.subr.bf16.mxu0 %v333
    %397 = vmatpush1.bf16.msra.mxu0 %v332
    %398 = vmatprep.subr.bf16.mxu0 %v335
    %399 = vmatpush1.bf16.msra.mxu0 %v334
    %400 = vmatprep.subr.bf16.mxu0 %v337
    %401 = vmatpush1.bf16.msra.mxu0 %v336
    %402 = vmatprep.subr.bf16.mxu0 %v339
    %403 = vmatpush1.bf16.msra.mxu0 %v338
    %404 = vmatprep.subr.bf16.mxu0 %v341
    %405 = vmatpush1.bf16.msra.mxu0 %v340
    %406 = vmatprep.subr.bf16.mxu0 %v343
    %407 = vmatpush1.bf16.msra.mxu0 %v342
    %408 = vmatprep.subr.bf16.mxu0 %v345
    %409 = vmatpush1.bf16.msra.mxu0 %v344
    %410 = vmatprep.subr.bf16.mxu0 %v347
    %411 = vmatpush1.bf16.msra.mxu0 %v346
    %412 = vmatprep.subr.bf16.mxu0 %v349
    %413 = vmatpush1.bf16.msra.mxu0 %v348
    %414 = vmatprep.subr.bf16.mxu0 %v351
    %415 = vmatpush1.bf16.msra.mxu0 %v350
    %416 = vmatprep.subr.bf16.mxu0 %v353
    %417 = vmatpush1.bf16.msra.mxu0 %v352
    %418 = vmatprep.mubr.bf16.mxu0 %v181
    %419 = vmatmul.mubr.bf16.gmra.mrb[0].mxu0 %v180
    %v420 = vpop.f32.mrb[0].mxu0
    %v421 = vadd.f32 %v219, %v420
    %v422 = vpop.f32.mrb[0].mxu0
    %v423 = vadd.f32 %v223, %v422
    %v424 = vpop.f32.mrb[0].mxu0
    %v425 = vpop.f32.mrb[0].mxu0
    %426 = vdwg.mxu0
    %v427 = vmax.f32 %v421, 0.0
    %v428 = vmax.f32 %v423, 0.0
    %v429 = vld [vmem:[%s6] sm:$0x3]
    %v430 = vpack.c.bf16 %v427, %v427
    %v431 = vpack.c.bf16 %v428, %v428
    %v432 = vld [vmem:[#allocation3] sm:$0x1]
    %434 = vset.pattern.permute.xlu0 0
    %435 = vperm.xlu0 %434, %v432
    %v436 = vpop.permute.xlu0 %435
    %v438 = vlaneseq
    %v439 = vshrl.u32 %v438, 7
    %v440 = vsub.s32 0, %v439
    %v441 = vrot.slane %v436, %v440
    %v444 = vunpack.c.l.s4 1966171168
    %v445 = vunpack.c.0.s8 %v444
    %v446 = vlaneseq
    %v447 = vshrl.u32 %v446, 7
    %v448 = vsub.s32 %v445, %v447
    %v449 = vrot.slane %v429, %v448
    %v450 = vcombine.high %v449, %v449
    %v452 = vunpack.c.l.s4 1966171168
    %v453 = vunpack.c.0.s8 %v452
    %v454 = vlaneseq
    %v455 = vshrl.u32 %v454, 7
    %v456 = vsub.s32 %v453, %v455
    %v457 = vrot.slane %v449, %v456
    %v459 = vunpack.c.l.s4 1966171168
    %v460 = vunpack.c.0.s8 %v459
    %v461 = vlaneseq
    %v462 = vshrl.u32 %v461, 7
    %v463 = vsub.s32 %v460, %v462
    %v464 = vrot.slane %v450, %v463
    %467 = vmatprep.subr.bf16.mxu0 %v431
    %468 = vmatpush1.bf16.xpose.msra.mxu0 %v430
    %469 = vmatprep.subr.bf16.mxu0 0
    %470 = vmatpush1.bf16.xpose.msra.mxu0 0
    %471 = vmatprep.subr.bf16.mxu0 0
    %472 = vmatpush1.bf16.xpose.msra.mxu0 0
    %473 = vmatprep.subr.bf16.mxu0 0
    %474 = vmatpush1.bf16.xpose.msra.mxu0 0
    %475 = vmatprep.subr.bf16.mxu0 0
    %476 = vmatpush1.bf16.xpose.msra.mxu0 0
    %477 = vmatprep.subr.bf16.mxu0 0
    %478 = vmatpush1.bf16.xpose.msra.mxu0 0
    %479 = vmatprep.subr.bf16.mxu0 0
    %480 = vmatpush1.bf16.xpose.msra.mxu0 0
    %481 = vmatprep.subr.bf16.mxu0 0
    %482 = vmatpush1.bf16.xpose.msra.mxu0 0
    %483 = vmatprep.subr.bf16.mxu0 0
    %484 = vmatpush1.bf16.xpose.msra.mxu0 0
    %485 = vmatprep.subr.bf16.mxu0 0
    %486 = vmatpush1.bf16.xpose.msra.mxu0 0
    %487 = vmatprep.subr.bf16.mxu0 0
    %488 = vmatpush1.bf16.xpose.msra.mxu0 0
    %489 = vmatprep.subr.bf16.mxu0 0
    %490 = vmatpush1.bf16.xpose.msra.mxu0 0
    %491 = vmatprep.subr.bf16.mxu0 0
    %492 = vmatpush1.bf16.xpose.msra.mxu0 0
    %493 = vmatprep.subr.bf16.mxu0 0
    %494 = vmatpush1.bf16.xpose.msra.mxu0 0
    %495 = vmatprep.subr.bf16.mxu0 0
    %496 = vmatpush1.bf16.xpose.msra.mxu0 0
    %497 = vmatprep.subr.bf16.mxu0 0
    %498 = vmatpush1.bf16.xpose.msra.mxu0 0
    %499 = vmatprep.mubr.bf16.mxu0 %v464
    %500 = vmatmul.mubr.bf16.gmra.mrb[0].mxu0 %v457
    %v501 = vpop.f32.mrb[0].mxu0
    %v502 = vadd.f32 %v441, %v501
    %v503 = vpop.f32.mrb[0].mxu0
    %v504 = vpop.f32.mrb[0].mxu0
    %v505 = vpop.f32.mrb[0].mxu0
    %506 = vdwg.mxu0
    %vm507 = vcmask 57344
    %508 = vst.msk [vmem:[#allocation12] sm:$0x1] %vm507, %v502
    // Predicated region
    $region50: #{random_reward_forward.1} parent=1 // pred_check
      _
    $region51: #{random_reward_forward.1} parent=1 // pred_check_branch
      %510 = sbr.rel (0) target = $region53
    $region52: #{random_reward_forward.1} parent=1 // pred_region
      %s512 = ssub.s32 16, 16
      %513 = vsyncadd [#allocation6], %s512
      %s515 = sshll.u32 [#allocation12], 4
      %s516 = int_to_ptr.vmem [resolvable:$true] %s515
      %518 = dma.vmem_to_hbm [thread:$0]  %s516, 16, %s8, [#allocation6]
    $region53: #{random_reward_forward.1} parent=1 // pred_fallthru
      _
    // Predicated region
    $region54: #{random_reward_forward.1} parent=1 // pred_check
      _
    $region55: #{random_reward_forward.1} parent=1 // pred_check_branch
      %520 = sbr.rel (0) target = $region57
    $region56: #{random_reward_forward.1} parent=1 // pred_region
      %521 = dma.done [#allocation6], 16
    $region57: #{random_reward_forward.1} parent=1 // pred_fallthru
      _
    %522 = vsyncpa [#allocation5], 1
    %523 = vsyncpa [#allocation8], 1
    %524 = vsyncpa [#allocation11], 1
    %525 = vsyncpa [#allocation6], 1

</llo_original>
